<compile_context>
chip_gen: v5e
topology: v5e:2x2
jax: 0.10.0
libtpu: 0.0.40
codegen_flags: <defaults>
</compile_context>

<pallas_src>
import jax
import jax.numpy as jnp
import numpy as np
from jax.experimental import pallas as pl
from jax.experimental.pallas import tpu as pltpu


def _round_up(x, m):
    return (x + m - 1) // m * m


def _pick_dim_tiling(d, align, candidates, slack=1.125):
    """Return (tile, padded_dim).

    Dims that fit in the largest candidate become a single aligned block (zero /
    minimal padding, no degenerate 8-row tiles).  Larger dims pick the biggest
    candidate whose padded size stays within `slack` of the minimum achievable
    padding, bounding both zero-padding waste and per-grid-step overhead.
    """
    if d <= candidates[0]:
        p = _round_up(d, align)
        return p, p
    padded = [(_round_up(d, t), t) for t in candidates]   # largest-first
    best = min(p for p, _ in padded)
    for p, t in padded:
        if p <= best * slack:
            return t, p
    return candidates[-1], _round_up(d, candidates[-1])


def _pad2d(a, rows, cols, dtype):
    a = a.astype(dtype)
    pr, pc = rows - a.shape[0], cols - a.shape[1]
    if pr or pc:
        a = jnp.pad(a, ((0, pr), (0, pc)))
    return a


def _pad1d(v, n):
    v = v.astype(jnp.float32)
    if v.shape[0] != n:
        v = jnp.pad(v, (0, n - v.shape[0]))
    return v


# --------------------- tiled linear kernel: x @ W^T + b ---------------------
# Accumulates directly into the resident output block (no scratch).  When BN is
# enabled, per-(M-tile, feature) partial sum / sum-of-squares are emitted from
# the already-VMEM-resident result at the last K step (VPU work hidden under
# MXU slack; saves a full HBM read of y for the stats pass).

def _linear_kernel(x_ref, w_ref, b_ref, o_ref, *stat_refs):
    k = pl.program_id(2)

    @pl.when(k == 0)
    def _():
        o_ref[...] = jnp.zeros_like(o_ref)

    o_ref[...] += jnp.dot(x_ref[...], w_ref[...],
                          preferred_element_type=jnp.float32)

    @pl.when(k == pl.num_programs(2) - 1)
    def _():
        y = o_ref[...] + b_ref[...]
        o_ref[...] = y
        if stat_refs:                           # fused BN partial statistics
            psum_ref, psumsq_ref = stat_refs    # (8, tn) blocks; row 0 holds data
            psum_ref[...] = jnp.zeros_like(psum_ref)
            psum_ref[0:1, :] = jnp.sum(y, axis=0, keepdims=True)
            psumsq_ref[...] = jnp.zeros_like(psumsq_ref)
            psumsq_ref[0:1, :] = jnp.sum(y * y, axis=0, keepdims=True)


def _linear_pallas(x_p, wt_p, b_p, tm, tn, tk, with_stats):
    Mp, Kp = x_p.shape
    _, Np = wt_p.shape
    gm, gn, gk = Mp // tm, Np // tn, Kp // tk

    out_shape = [jax.ShapeDtypeStruct((Mp, Np), jnp.float32)]
    out_specs = [pl.BlockSpec((tm, tn), lambda i, j, k: (i, j))]
    if with_stats:
        # 8-row blocks keep the sublane dim tile-aligned; only row 0 is used.
        out_shape += [jax.ShapeDtypeStruct((8 * gm, Np), jnp.float32)] * 2
        out_specs += [pl.BlockSpec((8, tn), lambda i, j, k: (i, j))] * 2

    outs = pl.pallas_call(
        _linear_kernel,
        out_shape=out_shape,
        grid=(gm, gn, gk),
        in_specs=[
            pl.BlockSpec((tm, tk), lambda i, j, k: (i, k)),   # x tile
            pl.BlockSpec((tk, tn), lambda i, j, k: (k, j)),   # W^T tile (pre-transposed)
            pl.BlockSpec((1, tn), lambda i, j, k: (0, j)),    # bias tile
        ],
        out_specs=out_specs,
        compiler_params=pltpu.CompilerParams(
            dimension_semantics=("parallel", "parallel", "arbitrary"),
            vmem_limit_bytes=48 * 1024 * 1024),
    )(x_p, wt_p, b_p)
    if with_stats:
        return outs[0], outs[1], outs[2]
    return outs[0], None, None


# ----------------- BN apply pass: y * scale + shift (M/N tiled) -------------

def _affine_kernel(y_ref, s_ref, t_ref, o_ref):
    o_ref[...] = y_ref[...] * s_ref[...] + t_ref[...]


def _affine_pallas(y_p, scale_p, shift_p, tm, tn):
    Mp, Np = y_p.shape
    return pl.pallas_call(
        _affine_kernel,
        out_shape=jax.ShapeDtypeStruct((Mp, Np), jnp.float32),
        grid=(Mp // tm, Np // tn),
        in_specs=[
            pl.BlockSpec((tm, tn), lambda i, j: (i, j)),
            pl.BlockSpec((1, tn), lambda i, j: (0, j)),
            pl.BlockSpec((1, tn), lambda i, j: (0, j)),
        ],
        out_specs=pl.BlockSpec((tm, tn), lambda i, j: (i, j)),
        compiler_params=pltpu.CompilerParams(
            dimension_semantics=("parallel", "parallel"),
            vmem_limit_bytes=32 * 1024 * 1024),
    )(y_p, scale_p, shift_p)


# ------------------------------- wrapper ------------------------------------

def linear_layer_forward(x, weight, bias=None, *, use_bias=True, use_bn=False,
                         bn_gamma=None, bn_beta=None, bn_eps=1e-5,
                         compute_dtype=jnp.float32):
    """Forward of the PyTorch LinearLayer module.

    x: (M, K), weight: (N, K) (nn.Linear layout), bias: (N,) or None.
    compute_dtype: jnp.float32 (default, bit-faithful) or jnp.bfloat16 (faster
    MXU path, f32 accumulation).
    """
    M, K = x.shape
    N, Kw = weight.shape
    assert K == Kw

    sub_align = 16 if compute_dtype == jnp.bfloat16 else 8
    tm, Mp = _pick_dim_tiling(M, sub_align, (512, 256, 128))
    tn, Np = _pick_dim_tiling(N, 128, (512, 256, 128))
    tk, Kp = _pick_dim_tiling(K, 128, (1024, 512, 256, 128))

    # v7x megacore: ensure at least one "parallel" grid axis has >= 2 blocks.
    if Mp // tm == 1 and Np // tn == 1 and tn % 256 == 0:
        tn //= 2

    # Padding is skipped inside _pad2d when shapes are already tile aligned.
    x_p = _pad2d(x, Mp, Kp, compute_dtype)
    wt_p = _pad2d(weight.T, Kp, Np, compute_dtype)   # one-time transpose to (K, N)

    # Linear bias only exists when use_bias and not use_bn (matches nn.Linear cfg).
    if use_bias and (not use_bn) and bias is not None:
        b_p = _pad1d(bias, Np).reshape(1, Np)
    else:
        b_p = jnp.zeros((1, Np), jnp.float32)

    y_p, psum, psumsq = _linear_pallas(x_p, wt_p, b_p, tm, tn, tk, with_stats=use_bn)

    if use_bn:
        g_p = _pad1d(bn_gamma, Np)
        bt_p = _pad1d(bn_beta, Np)
        # Reduce the tiny per-M-tile partials (padded rows of y are exactly zero,
        # so no row mask is needed) and fold mean/var/gamma/beta into one
        # per-feature affine transform.
        mean = jnp.sum(psum, axis=0) / M
        ex2 = jnp.sum(psumsq, axis=0) / M
        var = jnp.maximum(ex2 - mean * mean, 0.0)
        # TODO(synk): E[y^2]-mean^2 in f32 can lose precision for very-large-mean
        # activations (PyTorch uses a centered variance); acceptable for typical
        # normalized activations.
        inv_std = jax.lax.rsqrt(var + jnp.float32(bn_eps))
        scale = (g_p * inv_std).reshape(1, Np)
        shift = (bt_p - mean * g_p * inv_std).reshape(1, Np)
        y_p = _affine_pallas(y_p, scale, shift, tm, tn)

    if Mp == M and Np == N:
        return y_p
    return y_p[:M, :N]


if __name__ == "__main__":
    key = jax.random.PRNGKey(0)
    kx, kw, kb = jax.random.split(key, 3)

    batch, in_features, out_features = 16, 64, 32
    x = jax.random.normal(kx, (batch, in_features), dtype=jnp.float32)
    w = jax.random.normal(kw, (out_features, in_features), dtype=jnp.float32) * 0.1
    b = jax.random.normal(kb, (out_features,), dtype=jnp.float32) * 0.1

    # Config 1: use_bias=True, use_bn=False (module defaults).
    y1 = linear_layer_forward(x, w, b, use_bias=True, use_bn=False)
    jax.block_until_ready(y1)
    ref1 = x @ w.T + b
    np.testing.assert_allclose(np.asarray(y1), np.asarray(ref1),
                               rtol=5e-3, atol=5e-3)

    # Config 2: use_bn=True (no linear bias; BatchNorm1d with PyTorch init).
    gamma = jnp.ones((out_features,), jnp.float32)
    beta = jnp.zeros((out_features,), jnp.float32)
    y2 = linear_layer_forward(x, w, None, use_bias=True, use_bn=True,
                              bn_gamma=gamma, bn_beta=beta, bn_eps=1e-5)
    jax.block_until_ready(y2)
    z = x @ w.T
    mu = z.mean(axis=0, keepdims=True)
    var = z.var(axis=0, keepdims=True)          # biased var (BN training forward)
    ref2 = (z - mu) * jax.lax.rsqrt(var + 1e-5) * gamma + beta
    np.testing.assert_allclose(np.asarray(y2), np.asarray(ref2),
                               rtol=5e-3, atol=5e-3)

    # Config 3: bf16 compute path (f32 accumulation), looser tolerance.
    y3 = linear_layer_forward(x, w, b, use_bias=True, use_bn=False,
                              compute_dtype=jnp.bfloat16)
    jax.block_until_ready(y3)
    np.testing.assert_allclose(np.asarray(y3), np.asarray(ref1),
                               rtol=3e-2, atol=3e-2)

    print("KERNEL_OK")
</pallas_src>

<mosaic_0001>
module attributes {stable_mosaic.version = 11 : i64} {
  func.func @_linear_kernel(%arg0: i32, %arg1: i32, %arg2: i32, %arg3: memref<16x128xf32, #tpu.memory_space<vmem>>, %arg4: memref<128x128xf32, #tpu.memory_space<vmem>>, %arg5: memref<1x128xf32, #tpu.memory_space<vmem>>, %arg6: memref<16x128xf32, #tpu.memory_space<vmem>>) attributes {dimension_semantics = [#tpu.dimension_semantics<parallel>, #tpu.dimension_semantics<parallel>, #tpu.dimension_semantics<arbitrary>], iteration_bounds = array<i64: 1, 1, 1>, scalar_prefetch = 0 : i64, scratch_operands = 0 : i64, tpu.core_type = #tpu.core_type<tc>, window_params = [{transform_indices = @transform_0, window_bounds = array<i64: 16, 128>}, {transform_indices = @transform_1, window_bounds = array<i64: 128, 128>}, {transform_indices = @transform_2, window_bounds = array<i64: 1, 128>}, {transform_indices = @transform_3, window_bounds = array<i64: 16, 128>}]} {
    %c0_i32 = arith.constant 0 : i32
    %0 = arith.cmpi eq, %arg2, %c0_i32 : i32
    %1 = arith.extui %0 : i1 to i32
    %c0_i32_0 = arith.constant 0 : i32
    %2 = arith.cmpi ne, %1, %c0_i32_0 : i32
    scf.if %2 {
      %cst_10 = arith.constant 0.000000e+00 : f32
      %12 = vector.broadcast %cst_10 : f32 to vector<16x128xf32>
      %c0_11 = arith.constant 0 : index
      %c0_12 = arith.constant 0 : index
      %13 = vector.load %arg6[%c0_11, %c0_12] : memref<16x128xf32, #tpu.memory_space<vmem>>, vector<16x128xf32>
      tpu.vector_store %arg6[%c0_11, %c0_12], %12 {strides = array<i32>} : memref<16x128xf32, #tpu.memory_space<vmem>>, vector<16x128xf32>,
    } else {
    }
    %c0 = arith.constant 0 : index
    %c0_1 = arith.constant 0 : index
    %3 = vector.load %arg6[%c0, %c0_1] : memref<16x128xf32, #tpu.memory_space<vmem>>, vector<16x128xf32>
    %c0_2 = arith.constant 0 : index
    %c0_3 = arith.constant 0 : index
    %4 = vector.load %arg3[%c0_2, %c0_3] : memref<16x128xf32, #tpu.memory_space<vmem>>, vector<16x128xf32>
    %c0_4 = arith.constant 0 : index
    %c0_5 = arith.constant 0 : index
    %5 = vector.load %arg4[%c0_4, %c0_5] : memref<128x128xf32, #tpu.memory_space<vmem>>, vector<128x128xf32>
    %cst = arith.constant dense<0.000000e+00> : vector<16x128xf32>
    %6 = tpu.matmul %4, %5, %cst {dimension_numbers = #tpu.dot_dimension_numbers<[1], [0], [0], [1], [0, 0, 1, 1], [], []>} : vector<16x128xf32>, vector<128x128xf32>, vector<16x128xf32> -> vector<16x128xf32>
    %7 = arith.addf %3, %6 : vector<16x128xf32>
    %c0_6 = arith.constant 0 : index
    %c0_7 = arith.constant 0 : index
    %8 = vector.load %arg6[%c0_6, %c0_7] : memref<16x128xf32, #tpu.memory_space<vmem>>, vector<16x128xf32>
    tpu.vector_store %arg6[%c0_6, %c0_7], %7 {strides = array<i32>} : memref<16x128xf32, #tpu.memory_space<vmem>>, vector<16x128xf32>,
    %c0_i32_8 = arith.constant 0 : i32
    %9 = arith.cmpi eq, %arg2, %c0_i32_8 : i32
    %10 = arith.extui %9 : i1 to i32
    %c0_i32_9 = arith.constant 0 : i32
    %11 = arith.cmpi ne, %10, %c0_i32_9 : i32
    scf.if %11 {
      %c0_10 = arith.constant 0 : index
      %c0_11 = arith.constant 0 : index
      %12 = vector.load %arg6[%c0_10, %c0_11] : memref<16x128xf32, #tpu.memory_space<vmem>>, vector<16x128xf32>
      %c0_12 = arith.constant 0 : index
      %c0_13 = arith.constant 0 : index
      %13 = vector.load %arg5[%c0_12, %c0_13] : memref<1x128xf32, #tpu.memory_space<vmem>>, vector<1x128xf32>
      %14 = vector.broadcast %13 : vector<1x128xf32> to vector<16x128xf32>
      %15 = arith.addf %12, %14 : vector<16x128xf32>
      %c0_14 = arith.constant 0 : index
      %c0_15 = arith.constant 0 : index
      %16 = vector.load %arg6[%c0_14, %c0_15] : memref<16x128xf32, #tpu.memory_space<vmem>>, vector<16x128xf32>
      tpu.vector_store %arg6[%c0_14, %c0_15], %15 {strides = array<i32>} : memref<16x128xf32, #tpu.memory_space<vmem>>, vector<16x128xf32>,
    } else {
    }
    return
  }
  func.func @transform_0(%arg0: i32, %arg1: i32, %arg2: i32) -> (i32, i32) {
    %c0_i32 = arith.constant 0 : i32
    return %arg0, %arg2 : i32, i32
  }
  func.func @transform_1(%arg0: i32, %arg1: i32, %arg2: i32) -> (i32, i32) {
    %c0_i32 = arith.constant 0 : i32
    return %arg2, %arg1 : i32, i32
  }
  func.func @transform_2(%arg0: i32, %arg1: i32, %arg2: i32) -> (i32, i32) {
    %c0_i32 = arith.constant 0 : i32
    %c0_i32_0 = arith.constant 0 : i32
    return %c0_i32, %arg1 : i32, i32
  }
  func.func @transform_3(%arg0: i32, %arg1: i32, %arg2: i32) -> (i32, i32) {
    %c0_i32 = arith.constant 0 : i32
    return %arg0, %arg1 : i32, i32
  }
}

</mosaic_0001>

<llo_original>
// kernel: tpu_custom_call.1
$region0: #{tpu_custom_call.1}
  #allocation0 [shape = 'u32[]', space=smem, size = 0x4, offset = 0x4, fixed_abs, tag = 'smem constant byte address 0x4 - core index']
  #allocation1 [shape = 'u32[72,128]{1,0:T(1,128)}', space=vmem, size = 0x9000, scoped, tag = 'internal scratch']
  %s0 = inlined_call_operand.hbm [shape: f32[16,128], index: 0, kind: input, shape index: {}]
  %s1 = inlined_call_operand.hbm [shape: f32[128,128], index: 1, kind: input, shape index: {}]
  %s2 = inlined_call_operand.vmem [shape: f32[1,128], index: 2, kind: input, shape index: {}]
  %s3 = inlined_call_operand.hbm [shape: f32[16,128], index: 3, kind: output, shape index: {}]
  %s4 = sld [smem:[#allocation0]]
  $region38: #{tpu_custom_call.1} parent=0
    _
  %s6 = ssub.s32 1, %s4
  %s7 = scalar_select 0, %s6, %s4
  $region1: #{tpu_custom_call.1} parent=0
    #allocation2 [shape = 'u8[8192]{0}', space=vmem, size = 0x2000, scoped, tag = 'input window, operand 0, single buffered']
    #allocation3 [shape = 's32[1]{0}', space=sflag, size = 0x4, scoped, tag = 'scoped memory for tpu_custom_call.1']
    #allocation4 [shape = 's32[1]{0}', space=sflag, size = 0x4, scoped, tag = 'scoped memory for tpu_custom_call.1']
    #allocation5 [shape = 'u8[65536]{0}', space=vmem, size = 0x10000, scoped, tag = 'input window, operand 1, single buffered']
    #allocation6 [shape = 's32[1]{0}', space=sflag, size = 0x4, scoped, tag = 'scoped memory for tpu_custom_call.1']
    #allocation7 [shape = 'u8[8192]{0}', space=vmem, size = 0x2000, scoped, tag = 'output window, operand 0, single buffered']
    %8 = vsyncpa [#allocation3], 0
    %9 = vsyncpa [#allocation6], 0
    %10 = vsyncpa [#allocation4], 0
    // Predicated region
    $region2: #{tpu_custom_call.1} parent=1 // pred_check
      _
    $region3: #{tpu_custom_call.1} parent=1 // pred_check_branch
      %12 = sbr.rel (0) target = $region5
    $region4: #{tpu_custom_call.1} parent=1 // pred_region
      %14 = vsyncadd [#allocation3], 0
      %s15 = sshll.u32 %s0, 4
      %s16 = int_to_ptr.hbm [resolvable:$true] %s15
      %s17 = sshll.u32 [#allocation2], 4
      %s18 = int_to_ptr.vmem [resolvable:$true] %s17
      %23 = dma.hbm_to_vmem [thread:$0]  %s16, 256, %s18, [#allocation3], 128, 128, 8
    $region5: #{tpu_custom_call.1} parent=1 // pred_fallthru
      _
    // Predicated region
    $region6: #{tpu_custom_call.1} parent=1 // pred_check
      _
    $region7: #{tpu_custom_call.1} parent=1 // pred_check_branch
      %25 = sbr.rel (0) target = $region9
    $region8: #{tpu_custom_call.1} parent=1 // pred_region
      %27 = vsyncadd [#allocation6], 0
      %s28 = sshll.u32 %s1, 4
      %s29 = int_to_ptr.hbm [resolvable:$true] %s28
      %s30 = sshll.u32 [#allocation5], 4
      %s31 = int_to_ptr.vmem [resolvable:$true] %s30
      %36 = dma.hbm_to_vmem [thread:$0]  %s29, 2048, %s31, [#allocation6], 128, 128, 8
    $region9: #{tpu_custom_call.1} parent=1 // pred_fallthru
      _
    // Predicated region
    $region10: #{tpu_custom_call.1} parent=1 // pred_check
      _
    $region11: #{tpu_custom_call.1} parent=1 // pred_check_branch
      %38 = sbr.rel (0) target = $region13
    $region12: #{tpu_custom_call.1} parent=1 // pred_region
      _
    $region13: #{tpu_custom_call.1} parent=1 // pred_fallthru
      _
    // Predicated region
    $region14: #{tpu_custom_call.1} parent=1 // pred_check
      _
    $region15: #{tpu_custom_call.1} parent=1 // pred_check_branch
      %40 = sbr.rel (0) target = $region17
    $region16: #{tpu_custom_call.1} parent=1 // pred_region
      %42 = dma.done [#allocation3], 256
    $region17: #{tpu_custom_call.1} parent=1 // pred_fallthru
      _
    // Predicated region
    $region18: #{tpu_custom_call.1} parent=1 // pred_check
      _
    $region19: #{tpu_custom_call.1} parent=1 // pred_check_branch
      %44 = sbr.rel (0) target = $region21
    $region20: #{tpu_custom_call.1} parent=1 // pred_region
      %46 = dma.done [#allocation6], 2048
    $region21: #{tpu_custom_call.1} parent=1 // pred_fallthru
      _
    %p47 = scmp.eq.s32.totalorder 0, 0
    // Predicated region
    $region22: #{tpu_custom_call.1} parent=1 // pred_check
      %p48 = pneg %p47
    $region23: #{tpu_custom_call.1} parent=1 // pred_check_branch
      %50 = sbr.rel (%p48) target = $region25
    $region24: #{tpu_custom_call.1} parent=1 // pred_region
      %51 = vst [vmem:[#allocation7] sm:$0xff] 0.0
      %52 = vst [vmem:[#allocation7 + $0x8] sm:$0xff] 0.0
    $region25: #{tpu_custom_call.1} parent=1 // pred_fallthru
      _
    %v53 = vld [vmem:[#allocation7] sm:$0xff]
    %v54 = vld [vmem:[#allocation7 + $0x8] sm:$0xff]
    %v55 = vld [vmem:[#allocation2] sm:$0xff]
    %v56 = vld [vmem:[#allocation2 + $0x8] sm:$0xff]
    %v57 = vld [vmem:[#allocation5] sm:$0xff]
    %v58 = vld [vmem:[#allocation5 + $0x8] sm:$0xff]
    %v59 = vld [vmem:[#allocation5 + $0x10] sm:$0xff]
    %v60 = vld [vmem:[#allocation5 + $0x18] sm:$0xff]
    %v61 = vld [vmem:[#allocation5 + $0x20] sm:$0xff]
    %v62 = vld [vmem:[#allocation5 + $0x28] sm:$0xff]
    %v63 = vld [vmem:[#allocation5 + $0x30] sm:$0xff]
    %v64 = vld [vmem:[#allocation5 + $0x38] sm:$0xff]
    %v65 = vld [vmem:[#allocation5 + $0x40] sm:$0xff]
    %v66 = vld [vmem:[#allocation5 + $0x48] sm:$0xff]
    %v67 = vld [vmem:[#allocation5 + $0x50] sm:$0xff]
    %v68 = vld [vmem:[#allocation5 + $0x58] sm:$0xff]
    %v69 = vld [vmem:[#allocation5 + $0x60] sm:$0xff]
    %v70 = vld [vmem:[#allocation5 + $0x68] sm:$0xff]
    %v71 = vld [vmem:[#allocation5 + $0x70] sm:$0xff]
    %v72 = vld [vmem:[#allocation5 + $0x78] sm:$0xff]
    %73 = vmatpush.msra.mxu0 %v72
    %74 = vmatpush.msra.mxu0 %v71
    %75 = vmatpush.msra.mxu0 %v70
    %76 = vmatpush.msra.mxu0 %v69
    %77 = vmatpush.msra.mxu0 %v68
    %78 = vmatpush.msra.mxu0 %v67
    %79 = vmatpush.msra.mxu0 %v66
    %80 = vmatpush.msra.mxu0 %v65
    %81 = vmatpush.msra.mxu0 %v64
    %82 = vmatpush.msra.mxu0 %v63
    %83 = vmatpush.msra.mxu0 %v62
    %84 = vmatpush.msra.mxu0 %v61
    %85 = vmatpush.msra.mxu0 %v60
    %86 = vmatpush.msra.mxu0 %v59
    %87 = vmatpush.msra.mxu0 %v58
    %88 = vmatpush.msra.mxu0 %v57
    %89 = vmatmul.f32.gmra.mxu0 %v55
    %v90 = vpop.f32.mrf.mxu0
    %v91 = vadd.f32 0.0, %v90
    %92 = vmatmul.f32.gmra.mxu0 %v56
    %v93 = vpop.f32.mrf.mxu0
    %v94 = vadd.f32 0.0, %v93
    %95 = vdwg.mxu0
    %v96 = vadd.f32 %v53, %v91
    %v97 = vadd.f32 %v54, %v94
    %98 = vst [vmem:[#allocation7] sm:$0xff] %v96
    %99 = vst [vmem:[#allocation7 + $0x8] sm:$0xff] %v97
    // Predicated region
    $region26: #{tpu_custom_call.1} parent=1 // pred_check
      %p100 = pneg %p47
    $region27: #{tpu_custom_call.1} parent=1 // pred_check_branch
      %102 = sbr.rel (%p100) target = $region29
    $region28: #{tpu_custom_call.1} parent=1 // pred_region
      %v103 = vld [vmem:[#allocation7] sm:$0xff]
      %v104 = vld [vmem:[#allocation7 + $0x8] sm:$0xff]
      %v105 = vld [vmem:[%s2] sm:$0x1]
      %v107 = vperm.slane %v105, 0
      %v109 = vadd.f32 %v103, %v107
      %v110 = vadd.f32 %v104, %v107
      %111 = vst [vmem:[#allocation7] sm:$0xff] %v109
      %112 = vst [vmem:[#allocation7 + $0x8] sm:$0xff] %v110
    $region29: #{tpu_custom_call.1} parent=1 // pred_fallthru
      _
    // Predicated region
    $region30: #{tpu_custom_call.1} parent=1 // pred_check
      _
    $region31: #{tpu_custom_call.1} parent=1 // pred_check_branch
      %114 = sbr.rel (0) target = $region33
    $region32: #{tpu_custom_call.1} parent=1 // pred_region
      %116 = vsyncadd [#allocation4], 0
      %s117 = sshll.u32 [#allocation7], 4
      %s118 = int_to_ptr.vmem [resolvable:$true] %s117
      %s119 = sshll.u32 %s3, 4
      %s120 = int_to_ptr.hbm [resolvable:$true] %s119
      %125 = dma.vmem_to_hbm [thread:$0]  %s118, 256, %s120, [#allocation4], 128, 128, 8
    $region33: #{tpu_custom_call.1} parent=1 // pred_fallthru
      _
    // Predicated region
    $region34: #{tpu_custom_call.1} parent=1 // pred_check
      _
    $region35: #{tpu_custom_call.1} parent=1 // pred_check_branch
      %127 = sbr.rel (0) target = $region37
    $region36: #{tpu_custom_call.1} parent=1 // pred_region
      %129 = dma.done [#allocation4], 256
    $region37: #{tpu_custom_call.1} parent=1 // pred_fallthru
      _
    %130 = vsyncpa [#allocation3], 1
    %131 = vsyncpa [#allocation6], 1
    %132 = vsyncpa [#allocation4], 1

</llo_original>
